<compile_context>
chip_gen: v6e
topology: v6e:2x2x1
jax: 0.10.0
libtpu: 0.0.40
codegen_flags: <defaults>
</compile_context>

<pallas_src>
import functools

import jax
import jax.numpy as jnp
from jax import lax
from jax.experimental import pallas as pl
from jax.experimental.pallas import tpu as pltpu


# ----------------------------- Pallas kernel --------------------------------
def _conv1d_kernel(x_ref, w_ref, b_ref, o_ref, *, k_taps, l_tile, x_full_row):
    """One (batch, L-tile) grid step.

    x_ref : (Cin, L_pad)   if x_full_row (K>1, overlapping tap windows)
            (Cin, l_tile)  otherwise (K==1, x streamed tile-by-tile)
    w_ref : (K, Cout, Cin)   resident across the grid
    b_ref : (Cout, 1)
    o_ref : (Cout, l_tile)   lane dim = sequence positions (lane-dense)
    """
    if x_full_row:
        start = pl.multiple_of(pl.program_id(1) * l_tile, l_tile)
    acc = None
    for k in range(k_taps):                      # K is small & static
        if x_full_row:
            x_k = x_ref[:, pl.ds(start + k, l_tile)]
        else:
            x_k = x_ref[...]
        d = jnp.dot(w_ref[k], x_k, preferred_element_type=jnp.float32)
        acc = d if acc is None else acc + d
    o_ref[...] = (acc + b_ref[...]).astype(o_ref.dtype)


def conv1d_ncw(x, w_taps, bias_col, *, l_tile=512):
    """x: [N, Cin, L] (NCW), w_taps: [K, Cout, Cin], bias_col: [Cout, 1]
       -> [N, Cout, L - K + 1].  stride 1, no padding (nn.Conv1d defaults)."""
    N, Cin, L = x.shape
    K, Cout, _ = w_taps.shape
    L_out = L - K + 1

    # Sequence positions live on the lane (last) dim of the output, so tiles
    # are multiples of 128 (or the full, un-tiled L_out).
    if L_out <= l_tile:
        lt, n_lt = L_out, 1
    else:
        assert l_tile % 128 == 0, "l_tile must be a multiple of 128"
        lt, n_lt = l_tile, pl.cdiv(L_out, l_tile)
    L_out_pad = n_lt * lt
    L_pad = L_out_pad + K - 1
    if L_pad > L:
        x = jnp.pad(x, ((0, 0), (0, 0), (0, L_pad - L)))

    x_full_row = K > 1
    if x_full_row:
        # Overlapping tap windows: keep the whole row in VMEM, slice in-kernel.
        # TODO(synk): for K>1 with very long L this keeps Cin*L_pad resident in
        # VMEM; fine for this module whose default (and hot path) is K=1.
        x_spec = pl.BlockSpec((None, Cin, L_pad), lambda n, j: (n, 0, 0))
    else:
        x_spec = pl.BlockSpec((None, Cin, lt), lambda n, j: (n, 0, j))

    kernel = functools.partial(
        _conv1d_kernel, k_taps=K, l_tile=lt, x_full_row=x_full_row)

    bytes_accessed = 4 * (x.size + w_taps.size + bias_col.size
                          + N * Cout * L_out_pad)

    out = pl.pallas_call(
        kernel,
        out_shape=jax.ShapeDtypeStruct((N, Cout, L_out_pad), x.dtype),
        grid_spec=pltpu.PrefetchScalarGridSpec(
            num_scalar_prefetch=0,
            grid=(N, n_lt),
            in_specs=[
                x_spec,
                pl.BlockSpec((K, Cout, Cin), lambda n, j: (0, 0, 0)),
                pl.BlockSpec((Cout, 1), lambda n, j: (0, 0)),
            ],
            out_specs=pl.BlockSpec((None, Cout, lt), lambda n, j: (n, 0, j)),
        ),
        compiler_params=pltpu.CompilerParams(
            dimension_semantics=("parallel", "arbitrary"),
            vmem_limit_bytes=48 * 1024 * 1024),
        cost_estimate=pl.CostEstimate(
            flops=2 * N * K * Cout * Cin * L_out_pad,
            bytes_accessed=bytes_accessed,
            transcendentals=0),
    )(x, w_taps, bias_col)

    if L_out_pad != L_out:
        out = out[:, :, :L_out]
    return out


# ------------------------------ Module port ----------------------------------
class Conv1dPallas:
    """Port of model/inner/st_module/conv_layer.py::Conv1d (forward only)."""

    def __init__(self, in_channels, out_channels, kernel_size=1, dropout=0.1,
                 key=None):
        # TODO(synk): dropout arg is unused in the reference forward; no-op.
        if key is None:
            key = jax.random.PRNGKey(0)
        k_w, k_b = jax.random.split(key)

        self.in_channels = in_channels
        self.out_channels = out_channels
        self.kernel_size = kernel_size

        # nn.init.xavier_uniform_(weight, gain=1e-6), weight: [Cout, Cin, K]
        fan_in = in_channels * kernel_size
        fan_out = out_channels * kernel_size
        gain = 1e-6
        bound_w = gain * (6.0 / (fan_in + fan_out)) ** 0.5
        self.weight = jax.random.uniform(
            k_w, (out_channels, in_channels, kernel_size),
            minval=-bound_w, maxval=bound_w, dtype=jnp.float32)

        # nn.Conv1d default bias init: U(-1/sqrt(fan_in), 1/sqrt(fan_in))
        bound_b = 1.0 / (fan_in ** 0.5)
        self.bias = jax.random.uniform(
            k_b, (out_channels,), minval=-bound_b, maxval=bound_b,
            dtype=jnp.float32)

        # Hoisted kernel-friendly layouts (built ONCE, not per forward):
        # taps-major weight [K, Cout, Cin] and column bias [Cout, 1].
        self.w_taps = jnp.transpose(self.weight, (2, 0, 1))
        self.bias_col = self.bias.reshape(out_channels, 1)

    def __call__(self, x):
        if x.ndim == 4:
            b, n = x.shape[:2]
            y = conv1d_ncw(x.reshape((b * n,) + x.shape[2:]),
                           self.w_taps, self.bias_col)
            return y.reshape(b, n, -1, y.shape[-1])
        return conv1d_ncw(x, self.w_taps, self.bias_col)


# --------------------------------- main ---------------------------------------
if __name__ == "__main__":
    key = jax.random.PRNGKey(0)
    k_x, k_p, k_x2, k_p2 = jax.random.split(key, 4)

    def ref_conv(x_ncw, weight, bias):
        y = lax.conv_general_dilated(
            x_ncw, weight, window_strides=(1,), padding="VALID",
            dimension_numbers=("NCH", "OIH", "NCH"))
        return y + bias[None, :, None]

    # Test 1: the module's 4-D path, pointwise conv (kernel_size=1).
    b, n, c_in, c_out, L = 2, 4, 8, 16, 16
    x = jax.random.normal(k_x, (b, n, c_in, L), dtype=jnp.float32)
    mod = Conv1dPallas(c_in, c_out, kernel_size=1, key=k_p)
    y = jax.block_until_ready(mod(x))
    ref = ref_conv(x.reshape(b * n, c_in, L), mod.weight, mod.bias)
    ref = ref.reshape(b, n, c_out, L)
    assert y.shape == ref.shape, (y.shape, ref.shape)
    assert jnp.allclose(y, ref, atol=1e-5, rtol=1e-5), "mismatch (K=1 path)"

    # Test 2: 3-D path, kernel_size=3, long L to exercise L-tiling + taps.
    N2, c_in2, c_out2, L2, K2 = 2, 8, 16, 1026, 3
    x2 = jax.random.normal(k_x2, (N2, c_in2, L2), dtype=jnp.float32)
    mod2 = Conv1dPallas(c_in2, c_out2, kernel_size=K2, key=k_p2)
    y2 = jax.block_until_ready(mod2(x2))
    ref2 = ref_conv(x2, mod2.weight, mod2.bias)
    assert y2.shape == ref2.shape, (y2.shape, ref2.shape)
    assert jnp.allclose(y2, ref2, atol=1e-5, rtol=1e-5), "mismatch (K=3 path)"

    print("KERNEL_OK")
</pallas_src>

<mosaic_0001>
module attributes {stable_mosaic.version = 11 : i64} {
  func.func @_conv1d_kernel(%arg0: i32, %arg1: i32, %arg2: memref<1x8x16xf32, #tpu.memory_space<vmem>>, %arg3: memref<1x16x8xf32, #tpu.memory_space<vmem>>, %arg4: memref<16x1xf32, #tpu.memory_space<vmem>>, %arg5: memref<1x16x16xf32, #tpu.memory_space<vmem>>) attributes {dimension_semantics = [#tpu.dimension_semantics<parallel>, #tpu.dimension_semantics<arbitrary>], iteration_bounds = array<i64: 8, 1>, scalar_prefetch = 0 : i64, scratch_operands = 0 : i64, tpu.core_type = #tpu.core_type<tc>, window_params = [{transform_indices = @transform_0, window_bounds = array<i64: 1, 8, 16>}, {pipeline_mode = #tpu.pipeline_mode<synchronous>, transform_indices = @transform_1, window_bounds = array<i64: 1, 16, 8>}, {pipeline_mode = #tpu.pipeline_mode<synchronous>, transform_indices = @transform_2, window_bounds = array<i64: 16, 1>}, {transform_indices = @transform_3, window_bounds = array<i64: 1, 16, 16>}]} {
    %c0 = arith.constant 0 : index
    %c0_0 = arith.constant 0 : index
    %c0_1 = arith.constant 0 : index
    %0 = vector.load %arg2[%c0, %c0_0, %c0_1] : memref<1x8x16xf32, #tpu.memory_space<vmem>>, vector<1x8x16xf32>
    %1 = vector.shape_cast %0 : vector<1x8x16xf32> to vector<8x16xf32>
    %c0_2 = arith.constant 0 : index
    %c0_3 = arith.constant 0 : index
    %c0_4 = arith.constant 0 : index
    %2 = vector.load %arg3[%c0_2, %c0_3, %c0_4] : memref<1x16x8xf32, #tpu.memory_space<vmem>>, vector<1x16x8xf32>
    %3 = vector.shape_cast %2 : vector<1x16x8xf32> to vector<16x8xf32>
    %cst = arith.constant dense<0.000000e+00> : vector<16x16xf32>
    %4 = tpu.matmul %3, %1, %cst {dimension_numbers = #tpu.dot_dimension_numbers<[1], [0], [0], [1], [0, 0, 1, 1], [], []>} : vector<16x8xf32>, vector<8x16xf32>, vector<16x16xf32> -> vector<16x16xf32>
    %c0_5 = arith.constant 0 : index
    %c0_6 = arith.constant 0 : index
    %5 = vector.load %arg4[%c0_5, %c0_6] : memref<16x1xf32, #tpu.memory_space<vmem>>, vector<16x1xf32>
    %6 = vector.broadcast %5 : vector<16x1xf32> to vector<16x16xf32>
    %7 = arith.addf %4, %6 : vector<16x16xf32>
    %c0_7 = arith.constant 0 : index
    %c0_8 = arith.constant 0 : index
    %c0_9 = arith.constant 0 : index
    %8 = vector.load %arg5[%c0_7, %c0_8, %c0_9] : memref<1x16x16xf32, #tpu.memory_space<vmem>>, vector<1x16x16xf32>
    %9 = vector.shape_cast %8 : vector<1x16x16xf32> to vector<16x16xf32>
    %10 = vector.shape_cast %7 : vector<16x16xf32> to vector<1x16x16xf32>
    tpu.vector_store %arg5[%c0_7, %c0_8, %c0_9], %10 {strides = array<i32>} : memref<1x16x16xf32, #tpu.memory_space<vmem>>, vector<1x16x16xf32>,
    return
  }
  func.func @transform_0(%arg0: i32, %arg1: i32) -> (i32, i32, i32) {
    %c0_i32 = arith.constant 0 : i32
    %c0_i32_0 = arith.constant 0 : i32
    return %arg0, %c0_i32, %arg1 : i32, i32, i32
  }
  func.func @transform_1(%arg0: i32, %arg1: i32) -> (i32, i32, i32) {
    %c0_i32 = arith.constant 0 : i32
    %c0_i32_0 = arith.constant 0 : i32
    %c0_i32_1 = arith.constant 0 : i32
    %c0_i32_2 = arith.constant 0 : i32
    return %c0_i32, %c0_i32_0, %c0_i32_1 : i32, i32, i32
  }
  func.func @transform_2(%arg0: i32, %arg1: i32) -> (i32, i32) {
    %c0_i32 = arith.constant 0 : i32
    %c0_i32_0 = arith.constant 0 : i32
    %c0_i32_1 = arith.constant 0 : i32
    return %c0_i32, %c0_i32_0 : i32, i32
  }
  func.func @transform_3(%arg0: i32, %arg1: i32) -> (i32, i32, i32) {
    %c0_i32 = arith.constant 0 : i32
    %c0_i32_0 = arith.constant 0 : i32
    return %arg0, %c0_i32, %arg1 : i32, i32, i32
  }
}

</mosaic_0001>

<llo_original>
// kernel: tpu_custom_call.1
$region0: #{tpu_custom_call.1}
  #allocation0 [shape = 'u32[]', space=smem, size = 0x4, offset = 0x4, fixed_abs, tag = 'smem constant byte address 0x4 - core index']
  #allocation1 [shape = 'u32[144,128]{1,0:T(1,128)}', space=vmem, size = 0x12000, scoped, tag = 'internal scratch']
  %s0 = inlined_call_operand.hbm [shape: f32[8,8,16], index: 0, kind: input, shape index: {}]
  %s1 = inlined_call_operand.vmem [shape: f32[1,16,8], index: 1, kind: input, shape index: {}]
  %s2 = inlined_call_operand.vmem [shape: f32[16,1], index: 2, kind: input, shape index: {}]
  %s3 = inlined_call_operand.hbm [shape: f32[8,16,16], index: 3, kind: output, shape index: {}]
  %s4 = sld [smem:[#allocation0]]
  $region49: #{tpu_custom_call.1} parent=0
    _
  %s6 = ssub.s32 1, %s4
  %s7 = scalar_select 0, %s6, %s4
  $region1: #{tpu_custom_call.1} parent=0
    #allocation2 [shape = 'u8[8192]{0}', space=vmem, size = 0x2000, scoped, tag = 'input window, operand 0']
    #allocation3 [shape = 's32[2]{0}', space=sflag, size = 0x8, scoped, tag = 'scoped memory for tpu_custom_call.1']
    #allocation4 [shape = 's32[2]{0}', space=sflag, size = 0x8, scoped, tag = 'scoped memory for tpu_custom_call.1']
    #allocation5 [shape = 'u8[16384]{0}', space=vmem, size = 0x4000, scoped, tag = 'output window, operand 0']
    %8 = vsyncpa [#allocation3], 0
    %s9 = scalar_lea.sflag [#allocation3], 1
    %10 = vsyncpa %s9, 0
    %11 = vsyncpa [#allocation4], 0
    %s12 = scalar_lea.sflag [#allocation4], 1
    %13 = vsyncpa %s12, 0
    loop: start=0, step=1, limit=10
    $region2: #{tpu_custom_call.1} parent=1 // loop_pre_header
      _
    $region3: #{tpu_custom_call.1} parent=1 // loop_header
      %s15 = sphi 0, %s19
      %p16 = scmp.ge.s32.totalorder %s15, 10
      %s22 = sphi 0, %s34
      %s23 = sphi 0, %s30
      %s24 = sphi 0, %s22
      %s25 = sphi 0, %s23
      %s26 = sphi 0, %s24
      %s27 = sphi 0, %s25
      %s39 = sphi 0, %s41
      %s42 = sphi 0, %s39
      %s43 = sphi 0, %s42
      %s59 = sphi 0, %s43
      %s63 = sphi 0, %s63
      %s65 = sphi 0, %s63
      %s66 = sphi 0, %s65
      %s80 = sphi 0, %s66
      %s84 = sphi 0, %s84
      %s86 = sphi 0, %s84
      %s87 = sphi 0, %s86
      %s101 = sphi 0, %s87
      %s109 = sphi 0, %s111
      %s112 = sphi 0, %s109
      %s113 = sphi 0, %s112
      %s129 = sphi 0, %s113
    $region4: #{tpu_custom_call.1} parent=1 // loop_header_branch
      %18 = sbr.rel (%p16) target = $region8
    $region5: #{tpu_custom_call.1} parent=1 // loop_body
      %s20 = ssub.s32 %s15, 1
      %s21 = ssub.s32 %s15, 2
      %s28 = sadd.s32 1, %s23
      %p29 = scmp.ge.s32.totalorder %s28, 1
      %s30 = scalar_select %p29, 0, %s28
      %s31 = sadd.s32 1, %s22
      %s32 = scalar_select %p29, %s31, %s22
      %p33 = scmp.ge.s32.totalorder %s32, 8
      %s34 = scalar_select %p33, 0, %s32
      %s35 = ssub.s32 %s22, %s34
      %s36 = ssub.s32 %s23, %s30
      %s37 = sor.u32 %s35, %s36
      %p38 = scmp.eq.s32.totalorder %s37, 0
      %s40 = sadd.s32 %s39, 1
      %s41 = scalar_select %p38, %s39, %s40
      %p44 = pneg %p38
      %p45 = scmp.eq.s32.totalorder %s15, 7
      %p46 = por %p44, %p45
      %p47 = scmp.ne.s32.totalorder %s39, %s42
      %p48 = scmp.eq.s32.totalorder %s15, 0
      %p49 = por %p47, %p48
      %p50 = scmp.ne.s32.totalorder %s39, %s42
      %p51 = scmp.eq.s32.totalorder %s20, 7
      %p52 = por %p50, %p51
      %p53 = scmp.ne.s32.totalorder %s42, %s43
      %p54 = scmp.eq.s32.totalorder %s20, 0
      %p55 = por %p53, %p54
      %p56 = scmp.ne.s32.totalorder %s42, %s43
      %p57 = scmp.eq.s32.totalorder %s21, 7
      %p58 = por %p56, %p57
      %p60 = scmp.ne.s32.totalorder %s43, %s59
      %p61 = scmp.eq.s32.totalorder %s21, 0
      %p62 = por %p60, %p61
      %s64 = sadd.s32 %s63, 1
      %p67 = scmp.eq.s32.totalorder %s15, 7
      %p68 = scmp.ne.s32.totalorder %s63, %s65
      %p69 = scmp.eq.s32.totalorder %s15, 0
      %p70 = por %p68, %p69
      %p71 = scmp.ne.s32.totalorder %s63, %s65
      %p72 = scmp.eq.s32.totalorder %s20, 7
      %p73 = por %p71, %p72
      %p74 = scmp.ne.s32.totalorder %s65, %s66
      %p75 = scmp.eq.s32.totalorder %s20, 0
      %p76 = por %p74, %p75
      %p77 = scmp.ne.s32.totalorder %s65, %s66
      %p78 = scmp.eq.s32.totalorder %s21, 7
      %p79 = por %p77, %p78
      %p81 = scmp.ne.s32.totalorder %s66, %s80
      %p82 = scmp.eq.s32.totalorder %s21, 0
      %p83 = por %p81, %p82
      %s85 = sadd.s32 %s84, 1
      %p88 = scmp.eq.s32.totalorder %s15, 7
      %p89 = scmp.ne.s32.totalorder %s84, %s86
      %p90 = scmp.eq.s32.totalorder %s15, 0
      %p91 = por %p89, %p90
      %p92 = scmp.ne.s32.totalorder %s84, %s86
      %p93 = scmp.eq.s32.totalorder %s20, 7
      %p94 = por %p92, %p93
      %p95 = scmp.ne.s32.totalorder %s86, %s87
      %p96 = scmp.eq.s32.totalorder %s20, 0
      %p97 = por %p95, %p96
      %p98 = scmp.ne.s32.totalorder %s86, %s87
      %p99 = scmp.eq.s32.totalorder %s21, 7
      %p100 = por %p98, %p99
      %p102 = scmp.ne.s32.totalorder %s87, %s101
      %p103 = scmp.eq.s32.totalorder %s21, 0
      %p104 = por %p102, %p103
      %s105 = ssub.s32 %s22, %s34
      %s106 = ssub.s32 %s23, %s30
      %s107 = sor.u32 %s105, %s106
      %p108 = scmp.eq.s32.totalorder %s107, 0
      %s110 = sadd.s32 %s109, 1
      %s111 = scalar_select %p108, %s109, %s110
      %p114 = pneg %p108
      %p115 = scmp.eq.s32.totalorder %s15, 7
      %p116 = por %p114, %p115
      %p117 = scmp.ne.s32.totalorder %s109, %s112
      %p118 = scmp.eq.s32.totalorder %s15, 0
      %p119 = por %p117, %p118
      %p120 = scmp.ne.s32.totalorder %s109, %s112
      %p121 = scmp.eq.s32.totalorder %s20, 7
      %p122 = por %p120, %p121
      %p123 = scmp.ne.s32.totalorder %s112, %s113
      %p124 = scmp.eq.s32.totalorder %s20, 0
      %p125 = por %p123, %p124
      %p126 = scmp.ne.s32.totalorder %s112, %s113
      %p127 = scmp.eq.s32.totalorder %s21, 7
      %p128 = por %p126, %p127
      %p130 = scmp.ne.s32.totalorder %s113, %s129
      %p131 = scmp.eq.s32.totalorder %s21, 0
      %p132 = por %p130, %p131
      %p133 = scmp.le.s32.totalorder 1, %s15
      %p134 = scmp.lt.s32.totalorder %s15, 9
      %p135 = pnand %p133, %p134
      %p136 = pneg %p135
      // Predicated region
      $region9: #{tpu_custom_call.1} parent=5 // pred_check
        _
      $region10: #{tpu_custom_call.1} parent=5 // pred_check_branch
        %138 = sbr.rel (%p135) target = $region12
      $region11: #{tpu_custom_call.1} parent=5 // pred_region
        %s139 = ssub.s32 %s15, 1
        // Predicated region
        $region13: #{tpu_custom_call.1} parent=11 // pred_check
          %p140 = pneg %p76
        $region14: #{tpu_custom_call.1} parent=11 // pred_check_branch
          %142 = sbr.rel (%p140) target = $region16
        $region15: #{tpu_custom_call.1} parent=11 // pred_region
          _
        $region16: #{tpu_custom_call.1} parent=11 // pred_fallthru
          _
        // Predicated region
        $region17: #{tpu_custom_call.1} parent=11 // pred_check
          %p143 = pneg %p97
        $region18: #{tpu_custom_call.1} parent=11 // pred_check_branch
          %145 = sbr.rel (%p143) target = $region20
        $region19: #{tpu_custom_call.1} parent=11 // pred_region
          _
        $region20: #{tpu_custom_call.1} parent=11 // pred_fallthru
          _
      $region12: #{tpu_custom_call.1} parent=5 // pred_fallthru
        _
      %p146 = scmp.lt.s32.totalorder %s15, 8
      // Predicated region
      $region21: #{tpu_custom_call.1} parent=5 // pred_check
        %p147 = pneg %p146
      $region22: #{tpu_custom_call.1} parent=5 // pred_check_branch
        %149 = sbr.rel (%p147) target = $region24
      $region23: #{tpu_custom_call.1} parent=5 // pred_region
        // Predicated region
        $region25: #{tpu_custom_call.1} parent=23 // pred_check
          %p150 = pneg %p49
        $region26: #{tpu_custom_call.1} parent=23 // pred_check_branch
          %152 = sbr.rel (%p150) target = $region28
        $region27: #{tpu_custom_call.1} parent=23 // pred_region
          %s153 = sand.u32 %s39, 1
          %s154 = scalar_lea.sflag [#allocation3], %s153
          %s155 = sand.u32 %s39, 1
          %s156 = smul.addr %s155, 8
          %s157 = scalar_lea.vmem [#allocation2], %s156
          %s159 = ssub.s32 128, 128
          %160 = vsyncadd %s154, %s159
          %s161 = sadd.s32 %s23, %s22
          %s162 = smul.addr %s161, 128
          %s163 = scalar_lea.hbm %s0, %s162
          %s165 = sshll.u32 %s157, 4
          %s166 = int_to_ptr.vmem [resolvable:$true] %s165
          %168 = dma.hbm_to_vmem [thread:$0]  %s163, 128, %s166, %s154
        $region28: #{tpu_custom_call.1} parent=23 // pred_fallthru
          _
      $region24: #{tpu_custom_call.1} parent=5 // pred_fallthru
        _
      %p169 = scmp.le.s32.totalorder 1, %s15
      %p170 = scmp.lt.s32.totalorder %s15, 9
      %p171 = pnand %p169, %p170
      %p172 = pneg %p171
      // Predicated region
      $region29: #{tpu_custom_call.1} parent=5 // pred_check
        _
      $region30: #{tpu_custom_call.1} parent=5 // pred_check_branch
        %174 = sbr.rel (%p171) target = $region32
      $region31: #{tpu_custom_call.1} parent=5 // pred_region
        %s175 = ssub.s32 %s15, 1
        %s176 = sand.u32 %s42, 1
        %s177 = scalar_lea.sflag [#allocation3], %s176
        %s178 = sand.u32 %s42, 1
        %s179 = smul.addr %s178, 8
        %s180 = scalar_lea.vmem [#allocation2], %s179
        // Predicated region
        $region33: #{tpu_custom_call.1} parent=31 // pred_check
          %p181 = pneg %p55
        $region34: #{tpu_custom_call.1} parent=31 // pred_check_branch
          %183 = sbr.rel (%p181) target = $region36
        $region35: #{tpu_custom_call.1} parent=31 // pred_region
          %184 = dma.done %s177, 128
        $region36: #{tpu_custom_call.1} parent=31 // pred_fallthru
          _
        %s185 = sand.u32 %s42, 1
        %s186 = scalar_lea.sflag [#allocation3], %s185
        %s187 = sand.u32 %s42, 1
        %s188 = smul.addr %s187, 8
        %s189 = scalar_lea.vmem [#allocation2], %s188
        %p190 = pneg %p55
        %p191 = pneg %p52
        %p192 = pneg %p76
        %p193 = pneg %p73
        %p194 = pneg %p97
        %p195 = pneg %p94
        %p196 = pneg %p125
        %p197 = pneg %p122
        %s198 = sand.u32 %s112, 1
        %s199 = scalar_lea.sflag [#allocation4], %s198
        %s200 = sand.u32 %s112, 1
        %s201 = smul.addr %s200, 16
        %s202 = scalar_lea.vmem [#allocation5], %s201
        %v203 = vld [vmem:[%s180] sm:$0xff]
        %v204 = vld [vmem:[%s1] sm:$0xff]
        %v205 = vld [vmem:[%s1 + $0x8] sm:$0xff]
        %v206 = vld [vmem:[%s2] sm:$0xff]
        %v207 = vld [vmem:[%s2 + $0x8] sm:$0xff]
        %209 = vset.pattern.permute.xlu0 0
        %210 = vperm.xlu0 %209, %v206
        %v211 = vpop.permute.xlu0 %210
        %214 = vset.pattern.permute.xlu0 0
        %215 = vperm.xlu0 %214, %v207
        %v216 = vpop.permute.xlu0 %215
        %vm218 = vcmask 64512
        %v220 = vsel %vm218, %v204, 0
        %v223 = vsel %vm218, %v205, 0
        %225 = vmatprep.subr.mxu0 0.0
        %226 = vmatpush1.msra.mxu0 0.0
        %227 = vmatprep.subr.mxu0 0.0
        %228 = vmatpush1.msra.mxu0 0.0
        %229 = vmatprep.subr.mxu0 0.0
        %230 = vmatpush1.msra.mxu0 0.0
        %231 = vmatprep.subr.mxu0 0.0
        %232 = vmatpush1.msra.mxu0 0.0
        %233 = vmatprep.subr.mxu0 0.0
        %234 = vmatpush1.msra.mxu0 0.0
        %235 = vmatprep.subr.mxu0 0.0
        %236 = vmatpush1.msra.mxu0 0.0
        %237 = vmatprep.subr.mxu0 0.0
        %238 = vmatpush1.msra.mxu0 0.0
        %239 = vmatprep.subr.mxu0 0.0
        %240 = vmatpush1.msra.mxu0 0.0
        %241 = vmatprep.subr.mxu0 0.0
        %242 = vmatpush1.msra.mxu0 0.0
        %243 = vmatprep.subr.mxu0 0.0
        %244 = vmatpush1.msra.mxu0 0.0
        %245 = vmatprep.subr.mxu0 0.0
        %246 = vmatpush1.msra.mxu0 0.0
        %247 = vmatprep.subr.mxu0 0.0
        %248 = vmatpush1.msra.mxu0 0.0
        %249 = vmatprep.subr.mxu0 0.0
        %250 = vmatpush1.msra.mxu0 0.0
        %251 = vmatprep.subr.mxu0 0.0
        %252 = vmatpush1.msra.mxu0 0.0
        %253 = vmatprep.subr.mxu0 0.0
        %254 = vmatpush1.msra.mxu0 0.0
        %255 = vmatprep.subr.mxu0 0.0
        %256 = vmatpush1.msra.mxu0 %v203
        %257 = vmatprep.subr.mxu0 0.0
        %258 = vmatpush2.msra.mxu0 0.0
        %259 = vmatprep.subr.mxu0 0.0
        %260 = vmatpush2.msra.mxu0 0.0
        %261 = vmatprep.subr.mxu0 0.0
        %262 = vmatpush2.msra.mxu0 0.0
        %263 = vmatprep.subr.mxu0 0.0
        %264 = vmatpush2.msra.mxu0 0.0
        %265 = vmatprep.subr.mxu0 0.0
        %266 = vmatpush2.msra.mxu0 0.0
        %267 = vmatprep.subr.mxu0 0.0
        %268 = vmatpush2.msra.mxu0 0.0
        %269 = vmatprep.subr.mxu0 0.0
        %270 = vmatpush2.msra.mxu0 0.0
        %271 = vmatprep.subr.mxu0 0.0
        %272 = vmatpush2.msra.mxu0 0.0
        %273 = vmatprep.subr.mxu0 0.0
        %274 = vmatpush2.msra.mxu0 0.0
        %275 = vmatprep.subr.mxu0 0.0
        %276 = vmatpush2.msra.mxu0 0.0
        %277 = vmatprep.subr.mxu0 0.0
        %278 = vmatpush2.msra.mxu0 0.0
        %279 = vmatprep.subr.mxu0 0.0
        %280 = vmatpush2.msra.mxu0 0.0
        %281 = vmatprep.subr.mxu0 0.0
        %282 = vmatpush2.msra.mxu0 0.0
        %283 = vmatprep.subr.mxu0 0.0
        %284 = vmatpush2.msra.mxu0 0.0
        %285 = vmatprep.subr.mxu0 0.0
        %286 = vmatpush2.msra.mxu0 0.0
        %287 = vmatprep.subr.mxu0 0.0
        %288 = vmatpush2.msra.mxu0 0.0
        %289 = vmatprep.mubr.f32.mxu0 0.0
        %290 = vmatmul.mubr.f32.gmra.mxu0 %v220
        %v291 = vpop.f32.mrf.mxu0
        %v292 = vadd.f32 %v211, %v291
        %v293 = vpop.f32.mrf.mxu0
        %294 = vmatprep.mubr.f32.mxu0 0.0
        %295 = vmatmul.mubr.f32.gmra.mxu0 %v223
        %v296 = vpop.f32.mrf.mxu0
        %v297 = vadd.f32 %v216, %v296
        %v298 = vpop.f32.mrf.mxu0
        %299 = vdwg.mxu0
        %vm300 = vcmask 130048
        %301 = vst.msk [vmem:[%s202] sm:$0xff] %vm300, %v292
        %302 = vst.msk [vmem:[%s202 + $0x8] sm:$0xff] %vm300, %v297
        %s303 = sand.u32 %s112, 1
        %s304 = scalar_lea.sflag [#allocation4], %s303
        %s305 = sand.u32 %s112, 1
        %s306 = smul.addr %s305, 16
        %s307 = scalar_lea.vmem [#allocation5], %s306
        // Predicated region
        $region37: #{tpu_custom_call.1} parent=31 // pred_check
          %p308 = pneg %p122
        $region38: #{tpu_custom_call.1} parent=31 // pred_check_branch
          %310 = sbr.rel (%p308) target = $region40
        $region39: #{tpu_custom_call.1} parent=31 // pred_region
          %s312 = ssub.s32 256, 256
          %313 = vsyncadd %s304, %s312
          %s314 = smul.addr %s24, 2
          %s315 = sadd.s32 %s25, %s314
          %s316 = smul.addr %s315, 128
          %s317 = scalar_lea.hbm %s3, %s316
          %s318 = sshll.u32 %s307, 4
          %s319 = int_to_ptr.vmem [resolvable:$true] %s318
          %324 = dma.vmem_to_hbm [thread:$0]  %s319, 256, %s317, %s304, 128, 128, 8
        $region40: #{tpu_custom_call.1} parent=31 // pred_fallthru
          _
      $region32: #{tpu_custom_call.1} parent=5 // pred_fallthru
        _
      %p325 = scmp.le.s32.totalorder 2, %s15
      // Predicated region
      $region41: #{tpu_custom_call.1} parent=5 // pred_check
        %p326 = pneg %p325
      $region42: #{tpu_custom_call.1} parent=5 // pred_check_branch
        %328 = sbr.rel (%p326) target = $region44
      $region43: #{tpu_custom_call.1} parent=5 // pred_region
        %s329 = ssub.s32 %s15, 2
        // Predicated region
        $region45: #{tpu_custom_call.1} parent=43 // pred_check
          %p330 = pneg %p128
        $region46: #{tpu_custom_call.1} parent=43 // pred_check_branch
          %332 = sbr.rel (%p330) target = $region48
        $region47: #{tpu_custom_call.1} parent=43 // pred_region
          %s333 = sand.u32 %s113, 1
          %s334 = scalar_lea.sflag [#allocation4], %s333
          %s335 = sand.u32 %s113, 1
          %s336 = smul.addr %s335, 16
          %s337 = scalar_lea.vmem [#allocation5], %s336
          %338 = dma.done %s334, 256
        $region48: #{tpu_custom_call.1} parent=43 // pred_fallthru
          _
      $region44: #{tpu_custom_call.1} parent=5 // pred_fallthru
        _
    $region6: #{tpu_custom_call.1} parent=1 // loop_footer
      %s19 = sadd.s32 1, %s15
    $region7: #{tpu_custom_call.1} parent=1 // loop_footer_branch
      %14 = sbr.rel target = $region3
    $region8: #{tpu_custom_call.1} parent=1 // loop_exit
      _
    %339 = vsyncpa [#allocation3], 1
    %s340 = scalar_lea.sflag [#allocation3], 1
    %341 = vsyncpa %s340, 1
    %342 = vsyncpa [#allocation4], 1
    %s343 = scalar_lea.sflag [#allocation4], 1
    %344 = vsyncpa %s343, 1

</llo_original>
